<compile_context>
chip_gen: v7x
topology: tpu7x:2x2x1
jax: 0.10.0
libtpu: 0.0.40
codegen_flags: <defaults>
</compile_context>

<pallas_src>
import functools

import jax
import jax.numpy as jnp
from jax.experimental import pallas as pl
from jax.experimental.pallas import tpu as pltpu

LANE = 128


# ---------------------------------------------------------------------------
# Stage 1: per-node messages  m = gumbel_softmax(f_enc(x), tau)  (hard=False),
# computed feature-major (MSG, N) so the node axis fills all 128 lanes.
# ---------------------------------------------------------------------------
def msg_kernel(inv_tau, xt_ref, gumt_ref, w1t_ref, b1t_ref, w2t_ref, b2t_ref,
               mt_ref):
    xt = xt_ref[...]                                                    # (IN, TU)
    h1 = jnp.maximum(
        jnp.dot(w1t_ref[...], xt, preferred_element_type=jnp.float32)
        + b1t_ref[...], 0.0)                                            # (HID, TU)
    logits = (jnp.dot(w2t_ref[...], h1, preferred_element_type=jnp.float32)
              + b2t_ref[...])                                           # (MSG, TU)
    s = (logits + gumt_ref[...]) * inv_tau
    s = s - jnp.max(s, axis=0, keepdims=True)
    e = jnp.exp(s)
    mt_ref[...] = e * pl.reciprocal(jnp.sum(e, axis=0, keepdims=True),
                                    approx=True)                        # > 0


# ---------------------------------------------------------------------------
# Stage 2: masked running-max aggregation over source tiles + f_dec + GRUCell.
# ---------------------------------------------------------------------------
def agg_gru_kernel(out_feats, x_ref, z_ref, adj_ref, mt_ref,
                   wd_ref, bd_ref, wihx_ref, wihd_ref, bih_ref, whh_ref,
                   bhh_ref, h_ref, acc_ref):
    ui = pl.program_id(1)
    tv, tu = adj_ref.shape
    msg = mt_ref.shape[0]
    n_sub = tu // LANE

    @pl.when(ui == 0)
    def _init():
        # Messages are strictly positive (softmax), so 0 == "no contribution".
        # Precondition (holds for the test graph via self-loops): every node
        # has >= 1 in-neighbor; otherwise the reference itself yields -inf/NaN.
        acc_ref[...] = jnp.zeros_like(acc_ref)

    # One int8 unpack + compare per step; the mask is reused by every channel.
    mask = adj_ref[...].astype(jnp.float32) > 0.5                       # (TV, TU)
    mt = mt_ref[...]                                                    # (MSG, TU)

    # VALU-first reduction: fold the n_sub 128-lane groups of the u tile with
    # elementwise maximum; the 128-lane XLU reduce is deferred to _finish.
    # Channel-at-a-time keeps live vregs ~2 * (TV*128/1024) << 64 (no spills).
    for c in range(msg):
        folded = None
        for s in range(n_sub):
            grp = slice(s * LANE, (s + 1) * LANE)
            contrib = jnp.where(mask[:, grp], mt[c:c + 1, grp], 0.0)    # (TV, 128)
            folded = contrib if folded is None else jnp.maximum(folded, contrib)
        acc_ref[c] = jnp.maximum(acc_ref[c], folded)

    @pl.when(ui == pl.num_programs(1) - 1)
    def _finish():
        # One 128-lane max-reduce per channel, once per destination tile.
        y = jnp.concatenate(
            [jnp.max(acc_ref[c], axis=-1, keepdims=True) for c in range(msg)],
            axis=1)                                                     # (TV, MSG)
        x = x_ref[...]                                                  # (TV, IN)
        z = z_ref[...]                                                  # (TV, OUT)
        d = jnp.maximum(
            jnp.dot(y, wd_ref[...], preferred_element_type=jnp.float32)
            + bd_ref[...], 0.0)                                         # (TV, HID)
        # cat(x, d) @ W_ih == x @ W_ih[:IN] + d @ W_ih[IN:]
        gi = (jnp.dot(x, wihx_ref[...], preferred_element_type=jnp.float32)
              + jnp.dot(d, wihd_ref[...], preferred_element_type=jnp.float32)
              + bih_ref[...])                                           # (TV, 3*OUT)
        gh = (jnp.dot(z, whh_ref[...], preferred_element_type=jnp.float32)
              + bhh_ref[...])
        o = out_feats
        r = jax.nn.sigmoid(gi[:, :o] + gh[:, :o])
        zg = jax.nn.sigmoid(gi[:, o:2 * o] + gh[:, o:2 * o])
        n = jnp.tanh(gi[:, 2 * o:] + r * gh[:, 2 * o:])
        h_ref[...] = (1.0 - zg) * n + zg * z


def _round_up(v, m):
    return ((v + m - 1) // m) * m


def _pick_tile(req, n_pad):
    t = max(LANE, min(req, n_pad))
    t = (t // LANE) * LANE
    while n_pad % t:
        t -= LANE
    return t


def discrete_message_passing(x, z, adj, gumbel, params, tau,
                             tile_v=128, tile_u=512):
    n, in_feats = x.shape
    out_feats = z.shape[1]
    msg = gumbel.shape[1]

    # Pad the node axis to a multiple of 128 (zero rows/cols never contribute
    # because their adjacency entries are zero; padded outputs are dropped).
    n_pad = _round_up(n, LANE)
    tile_v = _pick_tile(tile_v, n_pad)
    tile_u = _pick_tile(tile_u, n_pad)
    nv, nu = n_pad // tile_v, n_pad // tile_u

    pad = n_pad - n
    if pad:
        x = jnp.pad(x, ((0, pad), (0, 0)))
        z = jnp.pad(z, ((0, pad), (0, 0)))
        gumbel = jnp.pad(gumbel, ((0, pad), (0, 0)))
        adj = jnp.pad(adj, ((0, pad), (0, pad)))

    # Layout plumbing done once in the wrapper (lane-dense message path).
    x_t = x.T                                    # (in_feats, n_pad)
    gum_t = gumbel.T                             # (msg, n_pad)
    adj_i8 = (adj != 0).astype(jnp.int8)         # adjacency is a {0,1} predicate

    # ---- stage 1: messages, computed once (not per destination tile) ----
    msg_weights = (params["w1"].T, params["b1"].T,
                   params["w2"].T, params["b2"].T)
    m_t = pl.pallas_call(
        functools.partial(msg_kernel, 1.0 / tau),
        out_shape=jax.ShapeDtypeStruct((msg, n_pad), jnp.float32),
        grid_spec=pltpu.PrefetchScalarGridSpec(
            num_scalar_prefetch=0,
            grid=(nu,),
            in_specs=[
                pl.BlockSpec((in_feats, tile_u), lambda ui: (0, ui)),   # x.T
                pl.BlockSpec((msg, tile_u), lambda ui: (0, ui)),        # gumbel.T
            ] + [pl.BlockSpec(w.shape, lambda ui: (0, 0)) for w in msg_weights],
            out_specs=pl.BlockSpec((msg, tile_u), lambda ui: (0, ui)),
        ),
        compiler_params=pltpu.CompilerParams(
            dimension_semantics=("parallel",),
            vmem_limit_bytes=32 * 1024 * 1024),
    )(x_t, gum_t, *msg_weights)

    # ---- stage 2: masked max aggregation + f_dec + GRUCell ----
    upd_weights = (params["wd"], params["bd"],
                   params["wih_x"], params["wih_d"], params["bih"],
                   params["whh"], params["bhh"])
    h = pl.pallas_call(
        functools.partial(agg_gru_kernel, out_feats),
        out_shape=jax.ShapeDtypeStruct((n_pad, out_feats), jnp.float32),
        grid_spec=pltpu.PrefetchScalarGridSpec(
            num_scalar_prefetch=0,
            grid=(nv, nu),
            in_specs=[
                pl.BlockSpec((tile_v, in_feats), lambda vi, ui: (vi, 0)),   # x
                pl.BlockSpec((tile_v, out_feats), lambda vi, ui: (vi, 0)),  # z
                pl.BlockSpec((tile_v, tile_u), lambda vi, ui: (vi, ui)),    # adj int8
                pl.BlockSpec((msg, tile_u), lambda vi, ui: (0, ui)),        # m_t
            ] + [pl.BlockSpec(w.shape, lambda vi, ui: (0, 0)) for w in upd_weights],
            out_specs=pl.BlockSpec((tile_v, out_feats), lambda vi, ui: (vi, 0)),
            # extended accumulator: lane reduce deferred to the last u step
            scratch_shapes=[pltpu.VMEM((msg, tile_v, LANE), jnp.float32)],
        ),
        compiler_params=pltpu.CompilerParams(
            dimension_semantics=("parallel", "arbitrary"),
            vmem_limit_bytes=32 * 1024 * 1024),
    )(x, z, adj_i8, m_t, *upd_weights)

    h = h[:n]
    return h, h


def reference(x, z, adj, gumbel, p, tau):
    h1 = jnp.maximum(x @ p["w1"] + p["b1"], 0.0)
    logits = h1 @ p["w2"] + p["b2"]
    m = jax.nn.softmax((logits + gumbel) / tau, axis=-1)
    y = jnp.max(jnp.where(adj[:, :, None] > 0.5, m[None, :, :], -jnp.inf), axis=1)
    d = jnp.maximum(y @ p["wd"] + p["bd"], 0.0)
    gi = x @ p["wih_x"] + d @ p["wih_d"] + p["bih"]
    gh = z @ p["whh"] + p["bhh"]
    o = z.shape[1]
    r = jax.nn.sigmoid(gi[:, :o] + gh[:, :o])
    zg = jax.nn.sigmoid(gi[:, o:2 * o] + gh[:, o:2 * o])
    n = jnp.tanh(gi[:, 2 * o:] + r * gh[:, 2 * o:])
    return (1.0 - zg) * n + zg * z


if __name__ == "__main__":
    # Small shapes consistent with the module's forward; N is deliberately not
    # a multiple of 128 so the new padding path is exercised.
    N = 300          # graph nodes (padded to 384 inside the wrapper)
    IN = 16          # in_feats
    HID = 32         # hidden_size
    MSG = 16         # msg_size
    OUT = 32         # out_feats
    TAU = 0.1

    key = jax.random.PRNGKey(0)
    ks = jax.random.split(key, 16)

    def init(k, shape, scale=0.1):
        return scale * jax.random.normal(k, shape, jnp.float32)

    params = {
        # f_enc
        "w1": init(ks[0], (IN, HID)),
        "b1": init(ks[1], (1, HID)),
        "w2": init(ks[2], (HID, MSG)),
        "b2": init(ks[3], (1, MSG)),
        # f_dec
        "wd": init(ks[4], (MSG, HID)),
        "bd": init(ks[5], (1, HID)),
        # GRUCell: W_ih is (IN+HID, 3*OUT), split into x- and d- parts
        "wih_x": init(ks[6], (IN, 3 * OUT)),
        "wih_d": init(ks[7], (HID, 3 * OUT)),
        "bih": init(ks[8], (1, 3 * OUT)),
        "whh": init(ks[9], (OUT, 3 * OUT)),
        "bhh": init(ks[10], (1, 3 * OUT)),
    }

    x = jax.random.normal(ks[11], (N, IN), jnp.float32)
    z = jax.random.normal(ks[12], (N, OUT), jnp.float32)

    # Random directed graph adjacency (adj[v, u] = 1 iff edge u -> v), with
    # self-loops so every node has at least one incoming message.
    adj = (jax.random.uniform(ks[13], (N, N)) < 0.1).astype(jnp.float32)
    adj = jnp.maximum(adj, jnp.eye(N, dtype=jnp.float32))

    # Deterministic gumbel noise for the gumbel-softmax messages.
    gumbel = jax.random.gumbel(ks[14], (N, MSG), jnp.float32)

    # tile_u=128 here so the multi-u-tile accumulate/init/finish path is
    # exercised even at this small N; the production default is tile_u=512.
    h_out, h_out2 = discrete_message_passing(x, z, adj, gumbel, params, TAU,
                                             tile_v=128, tile_u=128)
    h_out = jax.block_until_ready(h_out)

    ref = reference(x, z, adj, gumbel, params, TAU)
    assert h_out.shape == (N, OUT)
    assert jnp.allclose(h_out, ref, atol=5e-3, rtol=5e-3)

    print("KERNEL_OK")
</pallas_src>

<mosaic_0001>
module attributes {stable_mosaic.version = 11 : i64} {
  func.func @msg_kernel(%arg0: i32, %arg1: memref<16x128xf32, #tpu.memory_space<vmem>>, %arg2: memref<16x128xf32, #tpu.memory_space<vmem>>, %arg3: memref<32x16xf32, #tpu.memory_space<vmem>>, %arg4: memref<32x1xf32, #tpu.memory_space<vmem>>, %arg5: memref<16x32xf32, #tpu.memory_space<vmem>>, %arg6: memref<16x1xf32, #tpu.memory_space<vmem>>, %arg7: memref<16x128xf32, #tpu.memory_space<vmem>>) attributes {dimension_semantics = [#tpu.dimension_semantics<parallel>], iteration_bounds = array<i64: 3>, scalar_prefetch = 0 : i64, scratch_operands = 0 : i64, tpu.core_type = #tpu.core_type<tc>, window_params = [{transform_indices = @transform_0, window_bounds = array<i64: 16, 128>}, {transform_indices = @transform_1, window_bounds = array<i64: 16, 128>}, {pipeline_mode = #tpu.pipeline_mode<synchronous>, transform_indices = @transform_2, window_bounds = array<i64: 32, 16>}, {pipeline_mode = #tpu.pipeline_mode<synchronous>, transform_indices = @transform_3, window_bounds = array<i64: 32, 1>}, {pipeline_mode = #tpu.pipeline_mode<synchronous>, transform_indices = @transform_4, window_bounds = array<i64: 16, 32>}, {pipeline_mode = #tpu.pipeline_mode<synchronous>, transform_indices = @transform_5, window_bounds = array<i64: 16, 1>}, {transform_indices = @transform_6, window_bounds = array<i64: 16, 128>}]} {
    %c0 = arith.constant 0 : index
    %c0_0 = arith.constant 0 : index
    %0 = vector.load %arg1[%c0, %c0_0] : memref<16x128xf32, #tpu.memory_space<vmem>>, vector<16x128xf32>
    %c0_1 = arith.constant 0 : index
    %c0_2 = arith.constant 0 : index
    %1 = vector.load %arg3[%c0_1, %c0_2] : memref<32x16xf32, #tpu.memory_space<vmem>>, vector<32x16xf32>
    %cst = arith.constant dense<0.000000e+00> : vector<32x128xf32>
    %2 = tpu.matmul %1, %0, %cst {dimension_numbers = #tpu.dot_dimension_numbers<[1], [0], [0], [1], [0, 0, 1, 1], [], []>} : vector<32x16xf32>, vector<16x128xf32>, vector<32x128xf32> -> vector<32x128xf32>
    %c0_3 = arith.constant 0 : index
    %c0_4 = arith.constant 0 : index
    %3 = vector.load %arg4[%c0_3, %c0_4] : memref<32x1xf32, #tpu.memory_space<vmem>>, vector<32x1xf32>
    %4 = vector.broadcast %3 : vector<32x1xf32> to vector<32x128xf32>
    %5 = arith.addf %2, %4 : vector<32x128xf32>
    %cst_5 = arith.constant 0.000000e+00 : f32
    %6 = vector.broadcast %cst_5 : f32 to vector<32x128xf32>
    %7 = arith.maximumf %5, %6 : vector<32x128xf32>
    %c0_6 = arith.constant 0 : index
    %c0_7 = arith.constant 0 : index
    %8 = vector.load %arg5[%c0_6, %c0_7] : memref<16x32xf32, #tpu.memory_space<vmem>>, vector<16x32xf32>
    %cst_8 = arith.constant dense<0.000000e+00> : vector<16x128xf32>
    %9 = tpu.matmul %8, %7, %cst_8 {dimension_numbers = #tpu.dot_dimension_numbers<[1], [0], [0], [1], [0, 0, 1, 1], [], []>} : vector<16x32xf32>, vector<32x128xf32>, vector<16x128xf32> -> vector<16x128xf32>
    %c0_9 = arith.constant 0 : index
    %c0_10 = arith.constant 0 : index
    %10 = vector.load %arg6[%c0_9, %c0_10] : memref<16x1xf32, #tpu.memory_space<vmem>>, vector<16x1xf32>
    %11 = vector.broadcast %10 : vector<16x1xf32> to vector<16x128xf32>
    %12 = arith.addf %9, %11 : vector<16x128xf32>
    %c0_11 = arith.constant 0 : index
    %c0_12 = arith.constant 0 : index
    %13 = vector.load %arg2[%c0_11, %c0_12] : memref<16x128xf32, #tpu.memory_space<vmem>>, vector<16x128xf32>
    %14 = arith.addf %12, %13 : vector<16x128xf32>
    %cst_13 = arith.constant 1.000000e+01 : f32
    %15 = vector.broadcast %cst_13 : f32 to vector<16x128xf32>
    %16 = arith.mulf %14, %15 : vector<16x128xf32>
    %cst_14 = arith.constant dense<0xFF800000> : vector<128xf32>
    %17 = vector.multi_reduction <maximumf>, %16, %cst_14 [0] : vector<16x128xf32> to vector<128xf32>
    %18 = vector.shape_cast %17 : vector<128xf32> to vector<1x128xf32>
    %19 = vector.broadcast %18 : vector<1x128xf32> to vector<16x128xf32>
    %20 = arith.subf %16, %19 : vector<16x128xf32>
    %21 = math.exp %20 : vector<16x128xf32>
    %cst_15 = arith.constant dense<0.000000e+00> : vector<128xf32>
    %22 = vector.multi_reduction <add>, %21, %cst_15 [0] : vector<16x128xf32> to vector<128xf32>
    %23 = vector.shape_cast %22 : vector<128xf32> to vector<1x128xf32>
    %24 = tpu.reciprocal %23 {approx = true} : vector<1x128xf32> -> vector<1x128xf32>
    %25 = vector.broadcast %24 : vector<1x128xf32> to vector<16x128xf32>
    %26 = arith.mulf %21, %25 : vector<16x128xf32>
    %c0_16 = arith.constant 0 : index
    %c0_17 = arith.constant 0 : index
    %27 = vector.load %arg7[%c0_16, %c0_17] : memref<16x128xf32, #tpu.memory_space<vmem>>, vector<16x128xf32>
    tpu.vector_store %arg7[%c0_16, %c0_17], %26 {strides = array<i32>} : memref<16x128xf32, #tpu.memory_space<vmem>>, vector<16x128xf32>,
    return
  }
  func.func @transform_0(%arg0: i32) -> (i32, i32) {
    %c0_i32 = arith.constant 0 : i32
    %c0_i32_0 = arith.constant 0 : i32
    return %c0_i32, %arg0 : i32, i32
  }
  func.func @transform_1(%arg0: i32) -> (i32, i32) {
    %c0_i32 = arith.constant 0 : i32
    %c0_i32_0 = arith.constant 0 : i32
    return %c0_i32, %arg0 : i32, i32
  }
  func.func @transform_2(%arg0: i32) -> (i32, i32) {
    %c0_i32 = arith.constant 0 : i32
    %c0_i32_0 = arith.constant 0 : i32
    %c0_i32_1 = arith.constant 0 : i32
    return %c0_i32, %c0_i32_0 : i32, i32
  }
  func.func @transform_3(%arg0: i32) -> (i32, i32) {
    %c0_i32 = arith.constant 0 : i32
    %c0_i32_0 = arith.constant 0 : i32
    %c0_i32_1 = arith.constant 0 : i32
    return %c0_i32, %c0_i32_0 : i32, i32
  }
  func.func @transform_4(%arg0: i32) -> (i32, i32) {
    %c0_i32 = arith.constant 0 : i32
    %c0_i32_0 = arith.constant 0 : i32
    %c0_i32_1 = arith.constant 0 : i32
    return %c0_i32, %c0_i32_0 : i32, i32
  }
  func.func @transform_5(%arg0: i32) -> (i32, i32) {
    %c0_i32 = arith.constant 0 : i32
    %c0_i32_0 = arith.constant 0 : i32
    %c0_i32_1 = arith.constant 0 : i32
    return %c0_i32, %c0_i32_0 : i32, i32
  }
  func.func @transform_6(%arg0: i32) -> (i32, i32) {
    %c0_i32 = arith.constant 0 : i32
    %c0_i32_0 = arith.constant 0 : i32
    return %c0_i32, %arg0 : i32, i32
  }
}

</mosaic_0001>

<llo_original>
// kernel: tpu_custom_call.1
$region0: #{tpu_custom_call.1}
  #allocation0 [shape = 'u32[]', space=smem, size = 0x4, offset = 0x4, fixed_abs, tag = 'smem constant byte address 0x4 - core index']
  #allocation1 [shape = 'u32[144,128]{1,0:T(1,128)}', space=vmem, size = 0x12000, scoped, tag = 'internal scratch']
  %s0 = inlined_call_operand.vmem [shape: f32[16,384], index: 0, kind: input, shape index: {}]
  %s1 = inlined_call_operand.vmem [shape: f32[16,384], index: 1, kind: input, shape index: {}]
  %s2 = inlined_call_operand.vmem [shape: f32[32,16], index: 2, kind: input, shape index: {}]
  %s3 = inlined_call_operand.vmem [shape: f32[32,1], index: 3, kind: input, shape index: {}]
  %s4 = inlined_call_operand.vmem [shape: f32[16,32], index: 4, kind: input, shape index: {}]
  %s5 = inlined_call_operand.vmem [shape: f32[16,1], index: 5, kind: input, shape index: {}]
  %s6 = inlined_call_operand.hbm [shape: f32[16,384], index: 6, kind: output, shape index: {}]
  %s7 = sld [smem:[#allocation0]]
  $region133: #{tpu_custom_call.1} parent=0
    _
  %s9 = ssub.s32 1, %s7
  %s10 = scalar_select 0, %s9, %s7
  $region1: #{tpu_custom_call.1} parent=0
    #allocation2 [shape = 'u8[16384]{0}', space=vmem, size = 0x4000, scoped, tag = 'input window, operand 0']
    #allocation3 [shape = 'u8[16384]{0}', space=vmem, size = 0x4000, scoped, tag = 'input window, operand 1']
    #allocation4 [shape = 'u8[16384]{0}', space=vmem, size = 0x4000, scoped, tag = 'output window, operand 0']
    #allocation5 [shape = 's32[2]{0}', space=sflag, size = 0x8, scoped, tag = 'scoped memory for tpu_custom_call.1']
    %11 = vsyncpa [#allocation5], 0
    %s12 = scalar_lea.sflag [#allocation5], 1
    %13 = vsyncpa %s12, 0
    loop: start=0, step=1, limit=5
    $region2: #{tpu_custom_call.1} parent=1 // loop_pre_header
      _
    $region3: #{tpu_custom_call.1} parent=1 // loop_header
      %s15 = sphi 0, %s19
      %p16 = scmp.ge.s32.totalorder %s15, 5
      %s25 = sphi 0, %s27
      %s28 = sphi 0, %s25
      %s29 = sphi 0, %s28
      %s45 = sphi 0, %s29
      %s51 = sphi 0, %s53
      %s54 = sphi 0, %s51
      %s55 = sphi 0, %s54
      %s71 = sphi 0, %s55
      %s75 = sphi 0, %s75
      %s77 = sphi 0, %s75
      %s78 = sphi 0, %s77
      %s92 = sphi 0, %s78
      %s96 = sphi 0, %s96
      %s98 = sphi 0, %s96
      %s99 = sphi 0, %s98
      %s113 = sphi 0, %s99
      %s117 = sphi 0, %s117
      %s119 = sphi 0, %s117
      %s120 = sphi 0, %s119
      %s134 = sphi 0, %s120
      %s138 = sphi 0, %s138
      %s140 = sphi 0, %s138
      %s141 = sphi 0, %s140
      %s155 = sphi 0, %s141
      %s161 = sphi 0, %s163
      %s164 = sphi 0, %s161
      %s165 = sphi 0, %s164
      %s181 = sphi 0, %s165
    $region4: #{tpu_custom_call.1} parent=1 // loop_header_branch
      %18 = sbr.rel (%p16) target = $region8
    $region5: #{tpu_custom_call.1} parent=1 // loop_body
      %s20 = ssub.s32 %s15, 1
      %s21 = ssub.s32 %s15, 2
      %s22 = sadd.s32 %s15, 1
      %s23 = ssub.s32 %s15, %s22
      %p24 = scmp.eq.s32.totalorder %s23, 0
      %s26 = sadd.s32 %s25, 1
      %s27 = scalar_select %p24, %s25, %s26
      %p30 = pneg %p24
      %p31 = scmp.eq.s32.totalorder %s15, 2
      %p32 = por %p30, %p31
      %p33 = scmp.ne.s32.totalorder %s25, %s28
      %p34 = scmp.eq.s32.totalorder %s15, 0
      %p35 = por %p33, %p34
      %p36 = scmp.ne.s32.totalorder %s25, %s28
      %p37 = scmp.eq.s32.totalorder %s20, 2
      %p38 = por %p36, %p37
      %p39 = scmp.ne.s32.totalorder %s28, %s29
      %p40 = scmp.eq.s32.totalorder %s20, 0
      %p41 = por %p39, %p40
      %p42 = scmp.ne.s32.totalorder %s28, %s29
      %p43 = scmp.eq.s32.totalorder %s21, 2
      %p44 = por %p42, %p43
      %p46 = scmp.ne.s32.totalorder %s29, %s45
      %p47 = scmp.eq.s32.totalorder %s21, 0
      %p48 = por %p46, %p47
      %s49 = ssub.s32 %s15, %s22
      %p50 = scmp.eq.s32.totalorder %s49, 0
      %s52 = sadd.s32 %s51, 1
      %s53 = scalar_select %p50, %s51, %s52
      %p56 = pneg %p50
      %p57 = scmp.eq.s32.totalorder %s15, 2
      %p58 = por %p56, %p57
      %p59 = scmp.ne.s32.totalorder %s51, %s54
      %p60 = scmp.eq.s32.totalorder %s15, 0
      %p61 = por %p59, %p60
      %p62 = scmp.ne.s32.totalorder %s51, %s54
      %p63 = scmp.eq.s32.totalorder %s20, 2
      %p64 = por %p62, %p63
      %p65 = scmp.ne.s32.totalorder %s54, %s55
      %p66 = scmp.eq.s32.totalorder %s20, 0
      %p67 = por %p65, %p66
      %p68 = scmp.ne.s32.totalorder %s54, %s55
      %p69 = scmp.eq.s32.totalorder %s21, 2
      %p70 = por %p68, %p69
      %p72 = scmp.ne.s32.totalorder %s55, %s71
      %p73 = scmp.eq.s32.totalorder %s21, 0
      %p74 = por %p72, %p73
      %s76 = sadd.s32 %s75, 1
      %p79 = scmp.eq.s32.totalorder %s15, 2
      %p80 = scmp.ne.s32.totalorder %s75, %s77
      %p81 = scmp.eq.s32.totalorder %s15, 0
      %p82 = por %p80, %p81
      %p83 = scmp.ne.s32.totalorder %s75, %s77
      %p84 = scmp.eq.s32.totalorder %s20, 2
      %p85 = por %p83, %p84
      %p86 = scmp.ne.s32.totalorder %s77, %s78
      %p87 = scmp.eq.s32.totalorder %s20, 0
      %p88 = por %p86, %p87
      %p89 = scmp.ne.s32.totalorder %s77, %s78
      %p90 = scmp.eq.s32.totalorder %s21, 2
      %p91 = por %p89, %p90
      %p93 = scmp.ne.s32.totalorder %s78, %s92
      %p94 = scmp.eq.s32.totalorder %s21, 0
      %p95 = por %p93, %p94
      %s97 = sadd.s32 %s96, 1
      %p100 = scmp.eq.s32.totalorder %s15, 2
      %p101 = scmp.ne.s32.totalorder %s96, %s98
      %p102 = scmp.eq.s32.totalorder %s15, 0
      %p103 = por %p101, %p102
      %p104 = scmp.ne.s32.totalorder %s96, %s98
      %p105 = scmp.eq.s32.totalorder %s20, 2
      %p106 = por %p104, %p105
      %p107 = scmp.ne.s32.totalorder %s98, %s99
      %p108 = scmp.eq.s32.totalorder %s20, 0
      %p109 = por %p107, %p108
      %p110 = scmp.ne.s32.totalorder %s98, %s99
      %p111 = scmp.eq.s32.totalorder %s21, 2
      %p112 = por %p110, %p111
      %p114 = scmp.ne.s32.totalorder %s99, %s113
      %p115 = scmp.eq.s32.totalorder %s21, 0
      %p116 = por %p114, %p115
      %s118 = sadd.s32 %s117, 1
      %p121 = scmp.eq.s32.totalorder %s15, 2
      %p122 = scmp.ne.s32.totalorder %s117, %s119
      %p123 = scmp.eq.s32.totalorder %s15, 0
      %p124 = por %p122, %p123
      %p125 = scmp.ne.s32.totalorder %s117, %s119
      %p126 = scmp.eq.s32.totalorder %s20, 2
      %p127 = por %p125, %p126
      %p128 = scmp.ne.s32.totalorder %s119, %s120
      %p129 = scmp.eq.s32.totalorder %s20, 0
      %p130 = por %p128, %p129
      %p131 = scmp.ne.s32.totalorder %s119, %s120
      %p132 = scmp.eq.s32.totalorder %s21, 2
      %p133 = por %p131, %p132
      %p135 = scmp.ne.s32.totalorder %s120, %s134
      %p136 = scmp.eq.s32.totalorder %s21, 0
      %p137 = por %p135, %p136
      %s139 = sadd.s32 %s138, 1
      %p142 = scmp.eq.s32.totalorder %s15, 2
      %p143 = scmp.ne.s32.totalorder %s138, %s140
      %p144 = scmp.eq.s32.totalorder %s15, 0
      %p145 = por %p143, %p144
      %p146 = scmp.ne.s32.totalorder %s138, %s140
      %p147 = scmp.eq.s32.totalorder %s20, 2
      %p148 = por %p146, %p147
      %p149 = scmp.ne.s32.totalorder %s140, %s141
      %p150 = scmp.eq.s32.totalorder %s20, 0
      %p151 = por %p149, %p150
      %p152 = scmp.ne.s32.totalorder %s140, %s141
      %p153 = scmp.eq.s32.totalorder %s21, 2
      %p154 = por %p152, %p153
      %p156 = scmp.ne.s32.totalorder %s141, %s155
      %p157 = scmp.eq.s32.totalorder %s21, 0
      %p158 = por %p156, %p157
      %s159 = ssub.s32 %s15, %s22
      %p160 = scmp.eq.s32.totalorder %s159, 0
      %s162 = sadd.s32 %s161, 1
      %s163 = scalar_select %p160, %s161, %s162
      %p166 = pneg %p160
      %p167 = scmp.eq.s32.totalorder %s15, 2
      %p168 = por %p166, %p167
      %p169 = scmp.ne.s32.totalorder %s161, %s164
      %p170 = scmp.eq.s32.totalorder %s15, 0
      %p171 = por %p169, %p170
      %p172 = scmp.ne.s32.totalorder %s161, %s164
      %p173 = scmp.eq.s32.totalorder %s20, 2
      %p174 = por %p172, %p173
      %p175 = scmp.ne.s32.totalorder %s164, %s165
      %p176 = scmp.eq.s32.totalorder %s20, 0
      %p177 = por %p175, %p176
      %p178 = scmp.ne.s32.totalorder %s164, %s165
      %p179 = scmp.eq.s32.totalorder %s21, 2
      %p180 = por %p178, %p179
      %p182 = scmp.ne.s32.totalorder %s165, %s181
      %p183 = scmp.eq.s32.totalorder %s21, 0
      %p184 = por %p182, %p183
      %p185 = scmp.le.s32.totalorder 1, %s15
      %p186 = scmp.lt.s32.totalorder %s15, 4
      %p187 = pnand %p185, %p186
      %p188 = pneg %p187
      // Predicated region
      $region9: #{tpu_custom_call.1} parent=5 // pred_check
        _
      $region10: #{tpu_custom_call.1} parent=5 // pred_check_branch
        %190 = sbr.rel (%p187) target = $region12
      $region11: #{tpu_custom_call.1} parent=5 // pred_region
        %s191 = ssub.s32 %s15, 1
        // Predicated region
        $region13: #{tpu_custom_call.1} parent=11 // pred_check
          %p192 = pneg %p88
        $region14: #{tpu_custom_call.1} parent=11 // pred_check_branch
          %194 = sbr.rel (%p192) target = $region16
        $region15: #{tpu_custom_call.1} parent=11 // pred_region
          _
        $region16: #{tpu_custom_call.1} parent=11 // pred_fallthru
          _
        // Predicated region
        $region17: #{tpu_custom_call.1} parent=11 // pred_check
          %p195 = pneg %p109
        $region18: #{tpu_custom_call.1} parent=11 // pred_check_branch
          %197 = sbr.rel (%p195) target = $region20
        $region19: #{tpu_custom_call.1} parent=11 // pred_region
          _
        $region20: #{tpu_custom_call.1} parent=11 // pred_fallthru
          _
        // Predicated region
        $region21: #{tpu_custom_call.1} parent=11 // pred_check
          %p198 = pneg %p130
        $region22: #{tpu_custom_call.1} parent=11 // pred_check_branch
          %200 = sbr.rel (%p198) target = $region24
        $region23: #{tpu_custom_call.1} parent=11 // pred_region
          _
        $region24: #{tpu_custom_call.1} parent=11 // pred_fallthru
          _
        // Predicated region
        $region25: #{tpu_custom_call.1} parent=11 // pred_check
          %p201 = pneg %p151
        $region26: #{tpu_custom_call.1} parent=11 // pred_check_branch
          %203 = sbr.rel (%p201) target = $region28
        $region27: #{tpu_custom_call.1} parent=11 // pred_region
          _
        $region28: #{tpu_custom_call.1} parent=11 // pred_fallthru
          _
      $region12: #{tpu_custom_call.1} parent=5 // pred_fallthru
        _
      %p204 = scmp.lt.s32.totalorder %s15, 3
      // Predicated region
      $region29: #{tpu_custom_call.1} parent=5 // pred_check
        %p205 = pneg %p204
      $region30: #{tpu_custom_call.1} parent=5 // pred_check_branch
        %207 = sbr.rel (%p205) target = $region32
      $region31: #{tpu_custom_call.1} parent=5 // pred_region
        // Predicated region
        $region33: #{tpu_custom_call.1} parent=31 // pred_check
          %p208 = pneg %p35
        $region34: #{tpu_custom_call.1} parent=31 // pred_check_branch
          %210 = sbr.rel (%p208) target = $region36
        $region35: #{tpu_custom_call.1} parent=31 // pred_region
          %s211 = sand.u32 %s25, 1
          %s212 = sand.u32 %s25, 1
          %s213 = smul.addr %s212, 16
          %s214 = scalar_lea.vmem [#allocation2], %s213
          %s215 = smul.addr %s15, 8
          %s216 = scalar_lea.vmem %s0, %s215
          // Predicated region
          $region37: #{tpu_custom_call.1} parent=35 // pred_check
            _
          $region38: #{tpu_custom_call.1} parent=35 // pred_check_branch
            %218 = sbr.rel (0) target = $region40
          $region39: #{tpu_custom_call.1} parent=35 // pred_region
            // Predicated region
            $region41: #{tpu_custom_call.1} parent=39 // pred_check
              _
            $region42: #{tpu_custom_call.1} parent=39 // pred_check_branch
              %220 = sbr.rel (0) target = $region44
            $region43: #{tpu_custom_call.1} parent=39 // pred_region
              // Predicated region
              $region56: #{tpu_custom_call.1} parent=43 // pred_check
                _
              $region57: #{tpu_custom_call.1} parent=43 // pred_check_branch
                %237 = sbr.rel (0) target = $region59
              $region58: #{tpu_custom_call.1} parent=43 // pred_region
                loop: start=0, step=1, limit=1
                $region60: #{tpu_custom_call.1} parent=58 // loop_pre_header
                  _
                $region61: #{tpu_custom_call.1} parent=58 // loop_header
                  %s239 = sphi 0, %s243
                  %p240 = scmp.ge.s32.totalorder %s239, 1
                  %s244 = sphi %s216, %s216
                  %s245 = sphi %s214, %s214
                $region62: #{tpu_custom_call.1} parent=58 // loop_header_branch
                  %242 = sbr.rel (%p240) target = $region66
                $region63: #{tpu_custom_call.1} parent=58 // loop_body
                  %v246 = vld [vmem:[%s244] sm:$0xff]
                  %247 = vst [vmem:[%s245] sm:$0xff] %v246
                  %v248 = vld [vmem:[%s244 + $0x18] sm:$0xff]
                  %249 = vst [vmem:[%s245 + $0x8] sm:$0xff] %v248
                $region64: #{tpu_custom_call.1} parent=58 // loop_footer
                  %s243 = sadd.s32 1, %s239
                $region65: #{tpu_custom_call.1} parent=58 // loop_footer_branch
                  %238 = sbr.rel target = $region61
                $region66: #{tpu_custom_call.1} parent=58 // loop_exit
                  _
              $region59: #{tpu_custom_call.1} parent=43 // pred_fallthru
                _
              // Predicated region
              $region67: #{tpu_custom_call.1} parent=43 // pred_check
                _
              $region68: #{tpu_custom_call.1} parent=43 // pred_check_branch
                %251 = sbr.rel target = $region70
              $region69: #{tpu_custom_call.1} parent=43 // pred_region
                _
              $region70: #{tpu_custom_call.1} parent=43 // pred_fallthru
                _
            $region44: #{tpu_custom_call.1} parent=39 // pred_fallthru
              _
            // Predicated region
            $region45: #{tpu_custom_call.1} parent=39 // pred_check
              _
            $region46: #{tpu_custom_call.1} parent=39 // pred_check_branch
              %222 = sbr.rel target = $region48
            $region47: #{tpu_custom_call.1} parent=39 // pred_region
              loop: start=0, step=1, limit=1
              $region49: #{tpu_custom_call.1} parent=47 // loop_pre_header
                _
              $region50: #{tpu_custom_call.1} parent=47 // loop_header
                %s225 = sphi 0, %s229
                %p226 = scmp.ge.s32.totalorder %s225, 1
                %s230 = sphi %s216, %s216
                %s231 = sphi %s214, %s214
              $region51: #{tpu_custom_call.1} parent=47 // loop_header_branch
                %228 = sbr.rel (%p226) target = $region55
              $region52: #{tpu_custom_call.1} parent=47 // loop_body
                %v232 = vld [vmem:[%s230] sm:$0xff]
                %233 = vst [vmem:[%s231] sm:$0xff] %v232
                %v234 = vld [vmem:[%s230 + $0x18] sm:$0xff]
                %235 = vst [vmem:[%s231 + $0x8] sm:$0xff] %v234
              $region53: #{tpu_custom_call.1} parent=47 // loop_footer
                %s229 = sadd.s32 1, %s225
              $region54: #{tpu_custom_call.1} parent=47 // loop_footer_branch
                %224 = sbr.rel target = $region50
              $region55: #{tpu_custom_call.1} parent=47 // loop_exit
                _
            $region48: #{tpu_custom_call.1} parent=39 // pred_fallthru
              _
          $region40: #{tpu_custom_call.1} parent=35 // pred_fallthru
            _
          %252 = vnop
        $region36: #{tpu_custom_call.1} parent=31 // pred_fallthru
          _
        // Predicated region
        $region71: #{tpu_custom_call.1} parent=31 // pred_check
          %p253 = pneg %p61
        $region72: #{tpu_custom_call.1} parent=31 // pred_check_branch
          %255 = sbr.rel (%p253) target = $region74
        $region73: #{tpu_custom_call.1} parent=31 // pred_region
          %s256 = sand.u32 %s51, 1
          %s257 = sand.u32 %s51, 1
          %s258 = smul.addr %s257, 16
          %s259 = scalar_lea.vmem [#allocation3], %s258
          %s260 = smul.addr %s15, 8
          %s261 = scalar_lea.vmem %s1, %s260
          // Predicated region
          $region75: #{tpu_custom_call.1} parent=73 // pred_check
            _
          $region76: #{tpu_custom_call.1} parent=73 // pred_check_branch
            %263 = sbr.rel (0) target = $region78
          $region77: #{tpu_custom_call.1} parent=73 // pred_region
            // Predicated region
            $region79: #{tpu_custom_call.1} parent=77 // pred_check
              _
            $region80: #{tpu_custom_call.1} parent=77 // pred_check_branch
              %265 = sbr.rel (0) target = $region82
            $region81: #{tpu_custom_call.1} parent=77 // pred_region
              // Predicated region
              $region94: #{tpu_custom_call.1} parent=81 // pred_check
                _
              $region95: #{tpu_custom_call.1} parent=81 // pred_check_branch
                %282 = sbr.rel (0) target = $region97
              $region96: #{tpu_custom_call.1} parent=81 // pred_region
                loop: start=0, step=1, limit=1
                $region98: #{tpu_custom_call.1} parent=96 // loop_pre_header
                  _
                $region99: #{tpu_custom_call.1} parent=96 // loop_header
                  %s284 = sphi 0, %s288
                  %p285 = scmp.ge.s32.totalorder %s284, 1
                  %s289 = sphi %s261, %s261
                  %s290 = sphi %s259, %s259
                $region100: #{tpu_custom_call.1} parent=96 // loop_header_branch
                  %287 = sbr.rel (%p285) target = $region104
                $region101: #{tpu_custom_call.1} parent=96 // loop_body
                  %v291 = vld [vmem:[%s289] sm:$0xff]
                  %292 = vst [vmem:[%s290] sm:$0xff] %v291
                  %v293 = vld [vmem:[%s289 + $0x18] sm:$0xff]
                  %294 = vst [vmem:[%s290 + $0x8] sm:$0xff] %v293
                $region102: #{tpu_custom_call.1} parent=96 // loop_footer
                  %s288 = sadd.s32 1, %s284
                $region103: #{tpu_custom_call.1} parent=96 // loop_footer_branch
                  %283 = sbr.rel target = $region99
                $region104: #{tpu_custom_call.1} parent=96 // loop_exit
                  _
              $region97: #{tpu_custom_call.1} parent=81 // pred_fallthru
                _
              // Predicated region
              $region105: #{tpu_custom_call.1} parent=81 // pred_check
                _
              $region106: #{tpu_custom_call.1} parent=81 // pred_check_branch
                %296 = sbr.rel target = $region108
              $region107: #{tpu_custom_call.1} parent=81 // pred_region
                _
              $region108: #{tpu_custom_call.1} parent=81 // pred_fallthru
                _
            $region82: #{tpu_custom_call.1} parent=77 // pred_fallthru
              _
            // Predicated region
            $region83: #{tpu_custom_call.1} parent=77 // pred_check
              _
            $region84: #{tpu_custom_call.1} parent=77 // pred_check_branch
              %267 = sbr.rel target = $region86
            $region85: #{tpu_custom_call.1} parent=77 // pred_region
              loop: start=0, step=1, limit=1
              $region87: #{tpu_custom_call.1} parent=85 // loop_pre_header
                _
              $region88: #{tpu_custom_call.1} parent=85 // loop_header
                %s270 = sphi 0, %s274
                %p271 = scmp.ge.s32.totalorder %s270, 1
                %s275 = sphi %s261, %s261
                %s276 = sphi %s259, %s259
              $region89: #{tpu_custom_call.1} parent=85 // loop_header_branch
                %273 = sbr.rel (%p271) target = $region93
              $region90: #{tpu_custom_call.1} parent=85 // loop_body
                %v277 = vld [vmem:[%s275] sm:$0xff]
                %278 = vst [vmem:[%s276] sm:$0xff] %v277
                %v279 = vld [vmem:[%s275 + $0x18] sm:$0xff]
                %280 = vst [vmem:[%s276 + $0x8] sm:$0xff] %v279
              $region91: #{tpu_custom_call.1} parent=85 // loop_footer
                %s274 = sadd.s32 1, %s270
              $region92: #{tpu_custom_call.1} parent=85 // loop_footer_branch
                %269 = sbr.rel target = $region88
              $region93: #{tpu_custom_call.1} parent=85 // loop_exit
                _
            $region86: #{tpu_custom_call.1} parent=77 // pred_fallthru
              _
          $region78: #{tpu_custom_call.1} parent=73 // pred_fallthru
            _
          %297 = vnop
        $region74: #{tpu_custom_call.1} parent=31 // pred_fallthru
          _
      $region32: #{tpu_custom_call.1} parent=5 // pred_fallthru
        _
      %p298 = scmp.le.s32.totalorder 1, %s15
      %p299 = scmp.lt.s32.totalorder %s15, 4
      %p300 = pnand %p298, %p299
      %p301 = pneg %p300
      // Predicated region
      $region109: #{tpu_custom_call.1} parent=5 // pred_check
        _
      $region110: #{tpu_custom_call.1} parent=5 // pred_check_branch
        %303 = sbr.rel (%p300) target = $region112
      $region111: #{tpu_custom_call.1} parent=5 // pred_region
        %s304 = ssub.s32 %s15, 1
        %s305 = sand.u32 %s28, 1
        %s306 = sand.u32 %s28, 1
        %s307 = smul.addr %s306, 16
        %s308 = scalar_lea.vmem [#allocation2], %s307
        // Predicated region
        $region113: #{tpu_custom_call.1} parent=111 // pred_check
          %p309 = pneg %p41
        $region114: #{tpu_custom_call.1} parent=111 // pred_check_branch
          %311 = sbr.rel (%p309) target = $region116
        $region115: #{tpu_custom_call.1} parent=111 // pred_region
          _
        $region116: #{tpu_custom_call.1} parent=111 // pred_fallthru
          _
        %s312 = sand.u32 %s54, 1
        %s313 = sand.u32 %s54, 1
        %s314 = smul.addr %s313, 16
        %s315 = scalar_lea.vmem [#allocation3], %s314
        // Predicated region
        $region117: #{tpu_custom_call.1} parent=111 // pred_check
          %p316 = pneg %p67
        $region118: #{tpu_custom_call.1} parent=111 // pred_check_branch
          %318 = sbr.rel (%p316) target = $region120
        $region119: #{tpu_custom_call.1} parent=111 // pred_region
          _
        $region120: #{tpu_custom_call.1} parent=111 // pred_fallthru
          _
        %s319 = sand.u32 %s28, 1
        %s320 = sand.u32 %s28, 1
        %s321 = smul.addr %s320, 16
        %s322 = scalar_lea.vmem [#allocation2], %s321
        %p323 = pneg %p41
        %p324 = pneg %p38
        %s325 = sand.u32 %s54, 1
        %s326 = sand.u32 %s54, 1
        %s327 = smul.addr %s326, 16
        %s328 = scalar_lea.vmem [#allocation3], %s327
        %p329 = pneg %p67
        %p330 = pneg %p64
        %p331 = pneg %p88
        %p332 = pneg %p85
        %p333 = pneg %p109
        %p334 = pneg %p106
        %p335 = pneg %p130
        %p336 = pneg %p127
        %p337 = pneg %p151
        %p338 = pneg %p148
        %p339 = pneg %p177
        %p340 = pneg %p174
        %s341 = sand.u32 %s164, 1
        %s342 = scalar_lea.sflag [#allocation5], %s341
        %s343 = sand.u32 %s164, 1
        %s344 = smul.addr %s343, 16
        %s345 = scalar_lea.vmem [#allocation4], %s344
        %v346 = vld [vmem:[%s308] sm:$0xff]
        %v347 = vld [vmem:[%s308 + $0x8] sm:$0xff]
        %v348 = vld [vmem:[%s2] sm:$0xff]
        %v349 = vld [vmem:[%s2 + $0x8] sm:$0xff]
        %v350 = vld [vmem:[%s2 + $0x10] sm:$0xff]
        %v351 = vld [vmem:[%s2 + $0x18] sm:$0xff]
        %v352 = vld [vmem:[%s3] sm:$0xff]
        %v353 = vld [vmem:[%s3 + $0x8] sm:$0xff]
        %v354 = vld [vmem:[%s3 + $0x10] sm:$0xff]
        %v355 = vld [vmem:[%s3 + $0x18] sm:$0xff]
        %357 = vset.pattern.permute.xlu0 0
        %358 = vperm.xlu0 %357, %v352
        %v359 = vpop.permute.xlu0 %358
        %362 = vset.pattern.permute.xlu0 0
        %363 = vperm.xlu0 %362, %v353
        %v364 = vpop.permute.xlu0 %363
        %367 = vset.pattern.permute.xlu0 0
        %368 = vperm.xlu0 %367, %v354
        %v369 = vpop.permute.xlu0 %368
        %372 = vset.pattern.permute.xlu0 0
        %373 = vperm.xlu0 %372, %v355
        %v374 = vpop.permute.xlu0 %373
        %vm376 = vcmask 130048
        %v378 = vsel %vm376, %v348, 0
        %v381 = vsel %vm376, %v349, 0
        %v384 = vsel %vm376, %v350, 0
        %v387 = vsel %vm376, %v351, 0
        %389 = vmatprep.subr.mxu0 0.0
        %390 = vmatpush1.msra.mxu0 %v346
        %391 = vmatprep.subr.mxu0 0.0
        %392 = vmatpush1.msra.mxu0 %v347
        %393 = vmatprep.subr.mxu0 0.0
        %394 = vmatpush1.msra.mxu0 0.0
        %395 = vmatprep.subr.mxu0 0.0
        %396 = vmatpush1.msra.mxu0 0.0
        %397 = vmatprep.subr.mxu0 0.0
        %398 = vmatpush1.msra.mxu0 0.0
        %399 = vmatprep.subr.mxu0 0.0
        %400 = vmatpush1.msra.mxu0 0.0
        %401 = vmatprep.subr.mxu0 0.0
        %402 = vmatpush1.msra.mxu0 0.0
        %403 = vmatprep.subr.mxu0 0.0
        %404 = vmatpush1.msra.mxu0 0.0
        %405 = vmatprep.subr.mxu0 0.0
        %406 = vmatpush1.msra.mxu0 0.0
        %407 = vmatprep.subr.mxu0 0.0
        %408 = vmatpush1.msra.mxu0 0.0
        %409 = vmatprep.subr.mxu0 0.0
        %410 = vmatpush1.msra.mxu0 0.0
        %411 = vmatprep.subr.mxu0 0.0
        %412 = vmatpush1.msra.mxu0 0.0
        %413 = vmatprep.subr.mxu0 0.0
        %414 = vmatpush1.msra.mxu0 0.0
        %415 = vmatprep.subr.mxu0 0.0
        %416 = vmatpush1.msra.mxu0 0.0
        %417 = vmatprep.subr.mxu0 0.0
        %418 = vmatpush1.msra.mxu0 0.0
        %419 = vmatprep.subr.mxu0 0.0
        %420 = vmatpush1.msra.mxu0 0.0
        %421 = vmatprep.subr.mxu0 0.0
        %422 = vmatpush1.msra.mxu0 0.0
        %423 = vmatprep.subr.mxu0 0.0
        %424 = vmatpush1.msra.mxu0 0.0
        %425 = vmatprep.subr.mxu0 0.0
        %426 = vmatpush1.msra.mxu0 0.0
        %427 = vmatprep.subr.mxu0 0.0
        %428 = vmatpush1.msra.mxu0 0.0
        %429 = vmatprep.subr.mxu0 0.0
        %430 = vmatpush1.msra.mxu0 0.0
        %431 = vmatprep.subr.mxu0 0.0
        %432 = vmatpush1.msra.mxu0 0.0
        %433 = vmatprep.subr.mxu0 0.0
        %434 = vmatpush1.msra.mxu0 0.0
        %435 = vmatprep.subr.mxu0 0.0
        %436 = vmatpush1.msra.mxu0 0.0
        %437 = vmatprep.subr.mxu0 0.0
        %438 = vmatpush1.msra.mxu0 0.0
        %439 = vmatprep.subr.mxu0 0.0
        %440 = vmatpush1.msra.mxu0 0.0
        %441 = vmatprep.subr.mxu0 0.0
        %442 = vmatpush1.msra.mxu0 0.0
        %443 = vmatprep.subr.mxu0 0.0
        %444 = vmatpush1.msra.mxu0 0.0
        %445 = vmatprep.subr.mxu0 0.0
        %446 = vmatpush1.msra.mxu0 0.0
        %447 = vmatprep.subr.mxu0 0.0
        %448 = vmatpush1.msra.mxu0 0.0
        %449 = vmatprep.subr.mxu0 0.0
        %450 = vmatpush1.msra.mxu0 0.0
        %451 = vmatprep.subr.mxu0 0.0
        %452 = vmatpush1.msra.mxu0 0.0
        %453 = vmatprep.mubr.f32.mxu0 0.0
        %454 = vmatmul.mubr.f32.gmra.mrb[0].mxu0 %v378
        %v455 = vpop.f32.mrb[0].mxu0
        %v456 = vadd.f32 %v359, %v455
        %v457 = vpop.f32.mrb[0].mxu0
        %458 = vmatprep.mubr.f32.mxu0 0.0
        %459 = vmatmul.mubr.f32.gmra.mrb[0].mxu0 %v381
        %v460 = vpop.f32.mrb[0].mxu0
        %v461 = vadd.f32 %v364, %v460
        %v462 = vpop.f32.mrb[0].mxu0
        %463 = vmatprep.mubr.f32.mxu0 0.0
        %464 = vmatmul.mubr.f32.gmra.mrb[0].mxu0 %v384
        %v465 = vpop.f32.mrb[0].mxu0
        %v466 = vadd.f32 %v369, %v465
        %v467 = vpop.f32.mrb[0].mxu0
        %468 = vmatprep.mubr.f32.mxu0 0.0
        %469 = vmatmul.mubr.f32.gmra.mrb[0].mxu0 %v387
        %v470 = vpop.f32.mrb[0].mxu0
        %v471 = vadd.f32 %v374, %v470
        %v472 = vpop.f32.mrb[0].mxu0
        %473 = vdwg.mxu0
        %v474 = vmax.f32 %v456, 0.0
        %v475 = vmax.f32 %v461, 0.0
        %v476 = vmax.f32 %v466, 0.0
        %v477 = vmax.f32 %v471, 0.0
        %v478 = vld [vmem:[%s4] sm:$0xff]
        %v479 = vld [vmem:[%s4 + $0x8] sm:$0xff]
        %v480 = vld [vmem:[%s5] sm:$0xff]
        %v481 = vld [vmem:[%s5 + $0x8] sm:$0xff]
        %483 = vset.pattern.permute.xlu0 0
        %484 = vperm.xlu0 %483, %v480
        %v485 = vpop.permute.xlu0 %484
        %488 = vset.pattern.permute.xlu0 0
        %489 = vperm.xlu0 %488, %v481
        %v490 = vpop.permute.xlu0 %489
        %vm492 = vcmask 261120
        %v494 = vsel %vm492, %v478, 0
        %v497 = vsel %vm492, %v479, 0
        %499 = vmatprep.subr.mxu0 0.0
        %500 = vmatpush1.msra.mxu0 %v474
        %501 = vmatprep.subr.mxu0 0.0
        %502 = vmatpush1.msra.mxu0 %v475
        %503 = vmatprep.subr.mxu0 0.0
        %504 = vmatpush1.msra.mxu0 %v476
        %505 = vmatprep.subr.mxu0 0.0
        %506 = vmatpush1.msra.mxu0 %v477
        %507 = vmatprep.subr.mxu0 0.0
        %508 = vmatpush1.msra.mxu0 0.0
        %509 = vmatprep.subr.mxu0 0.0
        %510 = vmatpush1.msra.mxu0 0.0
        %511 = vmatprep.subr.mxu0 0.0
        %512 = vmatpush1.msra.mxu0 0.0
        %513 = vmatprep.subr.mxu0 0.0
        %514 = vmatpush1.msra.mxu0 0.0
        %515 = vmatprep.subr.mxu0 0.0
        %516 = vmatpush1.msra.mxu0 0.0
        %517 = vmatprep.subr.mxu0 0.0
        %518 = vmatpush1.msra.mxu0 0.0
        %519 = vmatprep.subr.mxu0 0.0
        %520 = vmatpush1.msra.mxu0 0.0
        %521 = vmatprep.subr.mxu0 0.0
        %522 = vmatpush1.msra.mxu0 0.0
        %523 = vmatprep.subr.mxu0 0.0
        %524 = vmatpush1.msra.mxu0 0.0
        %525 = vmatprep.subr.mxu0 0.0
        %526 = vmatpush1.msra.mxu0 0.0
        %527 = vmatprep.subr.mxu0 0.0
        %528 = vmatpush1.msra.mxu0 0.0
        %529 = vmatprep.subr.mxu0 0.0
        %530 = vmatpush1.msra.mxu0 0.0
        %531 = vmatprep.subr.mxu0 0.0
        %532 = vmatpush1.msra.mxu0 0.0
        %533 = vmatprep.subr.mxu0 0.0
        %534 = vmatpush1.msra.mxu0 0.0
        %535 = vmatprep.subr.mxu0 0.0
        %536 = vmatpush1.msra.mxu0 0.0
        %537 = vmatprep.subr.mxu0 0.0
        %538 = vmatpush1.msra.mxu0 0.0
        %539 = vmatprep.subr.mxu0 0.0
        %540 = vmatpush1.msra.mxu0 0.0
        %541 = vmatprep.subr.mxu0 0.0
        %542 = vmatpush1.msra.mxu0 0.0
        %543 = vmatprep.subr.mxu0 0.0
        %544 = vmatpush1.msra.mxu0 0.0
        %545 = vmatprep.subr.mxu0 0.0
        %546 = vmatpush1.msra.mxu0 0.0
        %547 = vmatprep.subr.mxu0 0.0
        %548 = vmatpush1.msra.mxu0 0.0
        %549 = vmatprep.subr.mxu0 0.0
        %550 = vmatpush1.msra.mxu0 0.0
        %551 = vmatprep.subr.mxu0 0.0
        %552 = vmatpush1.msra.mxu0 0.0
        %553 = vmatprep.subr.mxu0 0.0
        %554 = vmatpush1.msra.mxu0 0.0
        %555 = vmatprep.subr.mxu0 0.0
        %556 = vmatpush1.msra.mxu0 0.0
        %557 = vmatprep.subr.mxu0 0.0
        %558 = vmatpush1.msra.mxu0 0.0
        %559 = vmatprep.subr.mxu0 0.0
        %560 = vmatpush1.msra.mxu0 0.0
        %561 = vmatprep.subr.mxu0 0.0
        %562 = vmatpush1.msra.mxu0 0.0
        %563 = vmatprep.mubr.f32.mxu0 0.0
        %564 = vmatmul.mubr.f32.gmra.mrb[0].mxu0 %v494
        %v565 = vpop.f32.mrb[0].mxu0
        %v566 = vadd.f32 %v485, %v565
        %v567 = vpop.f32.mrb[0].mxu0
        %568 = vmatprep.mubr.f32.mxu0 0.0
        %569 = vmatmul.mubr.f32.gmra.mrb[0].mxu0 %v497
        %v570 = vpop.f32.mrb[0].mxu0
        %v571 = vadd.f32 %v490, %v570
        %v572 = vpop.f32.mrb[0].mxu0
        %573 = vdwg.mxu0
        %v574 = vld [vmem:[%s315] sm:$0xff]
        %v575 = vld [vmem:[%s315 + $0x8] sm:$0xff]
        %v576 = vadd.f32 %v566, %v574
        %v577 = vadd.f32 %v571, %v575
        %v578 = vmul.f32 %v576, 10.0
        %v579 = vmul.f32 %v577, 10.0
        %v580 = vmax.f32 %v578, %v579
        %v581 = vrot.slane %v580, 4
        %v582 = vmax.f32 %v580, %v581
        %v583 = vrot.slane %v582, 2
        %v584 = vmax.f32 %v582, %v583
        %v585 = vrot.slane %v584, 1
        %v586 = vmax.f32 %v584, %v585
        %v587 = vsub.f32 %v578, %v586
        %v588 = vsub.f32 %v579, %v586
        %v589 = vmul.f32 %v587, 1.442695
        %v590 = vpow.pop %v589
        %v591 = vmul.f32 %v588, 1.442695
        %v592 = vpow.pop %v591
        %v593 = vadd.f32 %v590, %v592
        %v594 = vrot.slane %v593, 4
        %v595 = vadd.f32 %v593, %v594
        %v596 = vrot.slane %v595, 2
        %v597 = vadd.f32 %v595, %v596
        %v598 = vrot.slane %v597, 1
        %v599 = vadd.f32 %v597, %v598
        %v600 = vrcp.pop %v599
        %v601 = vmul.f32 %v590, %v600
        %v602 = vmul.f32 %v592, %v600
        %603 = vst [vmem:[%s345] sm:$0xff] %v601
        %604 = vst [vmem:[%s345 + $0x8] sm:$0xff] %v602
        %s605 = sand.u32 %s164, 1
        %s606 = scalar_lea.sflag [#allocation5], %s605
        %s607 = sand.u32 %s164, 1
        %s608 = smul.addr %s607, 16
        %s609 = scalar_lea.vmem [#allocation4], %s608
        // Predicated region
        $region121: #{tpu_custom_call.1} parent=111 // pred_check
          %p610 = pneg %p174
        $region122: #{tpu_custom_call.1} parent=111 // pred_check_branch
          %612 = sbr.rel (%p610) target = $region124
        $region123: #{tpu_custom_call.1} parent=111 // pred_region
          %s614 = ssub.s32 256, 256
          %615 = vsyncadd %s606, %s614
          %s616 = smul.addr %s20, 128
          %s617 = scalar_lea.hbm %s6, %s616
          %s618 = sshll.u32 %s609, 4
          %s619 = int_to_ptr.vmem [resolvable:$true] %s618
          %624 = dma.vmem_to_hbm [thread:$0]  %s619, 256, %s617, %s606, 128, 384, 8
        $region124: #{tpu_custom_call.1} parent=111 // pred_fallthru
          _
      $region112: #{tpu_custom_call.1} parent=5 // pred_fallthru
        _
      %p625 = scmp.le.s32.totalorder 2, %s15
      // Predicated region
      $region125: #{tpu_custom_call.1} parent=5 // pred_check
        %p626 = pneg %p625
      $region126: #{tpu_custom_call.1} parent=5 // pred_check_branch
        %628 = sbr.rel (%p626) target = $region128
      $region127: #{tpu_custom_call.1} parent=5 // pred_region
        %s629 = ssub.s32 %s15, 2
        // Predicated region
        $region129: #{tpu_custom_call.1} parent=127 // pred_check
          %p630 = pneg %p180
        $region130: #{tpu_custom_call.1} parent=127 // pred_check_branch
          %632 = sbr.rel (%p630) target = $region132
        $region131: #{tpu_custom_call.1} parent=127 // pred_region
          %s633 = sand.u32 %s165, 1
          %s634 = scalar_lea.sflag [#allocation5], %s633
          %s635 = sand.u32 %s165, 1
          %s636 = smul.addr %s635, 16
          %s637 = scalar_lea.vmem [#allocation4], %s636
          %638 = dma.done %s634, 256
        $region132: #{tpu_custom_call.1} parent=127 // pred_fallthru
          _
      $region128: #{tpu_custom_call.1} parent=5 // pred_fallthru
        _
    $region6: #{tpu_custom_call.1} parent=1 // loop_footer
      %s19 = sadd.s32 1, %s15
    $region7: #{tpu_custom_call.1} parent=1 // loop_footer_branch
      %14 = sbr.rel target = $region3
    $region8: #{tpu_custom_call.1} parent=1 // loop_exit
      _
    %639 = vsyncpa [#allocation5], 1
    %s640 = scalar_lea.sflag [#allocation5], 1
    %641 = vsyncpa %s640, 1

</llo_original>
